<compile_context>
chip_gen: v5e
topology: v5e:2x2
jax: 0.10.0
libtpu: 0.0.40
codegen_flags: <defaults>
</compile_context>

<pallas_src>
import numpy as np
import jax
import jax.numpy as jnp
from jax.experimental import pallas as pl
from jax.experimental.pallas import tpu as pltpu

# ---- model / problem sizes (small, consistent with DGCNN(xdim=(B, N, F), k_adj=K, num_out)) ----
B, N, F_IN = 2, 16, 16          # xdim = (B, xdim[1]=N, xdim[2]=F_IN)
K = 3                           # k_adj (Chebyshev order)
NUM_OUT = 32                    # per-node output features of the graph conv
HIDDEN = 64                     # fc1 width
NCLASS = 3
BN_EPS = 1e-5
NORM_EPS = 1e-10                # normalize_A eps

# power-of-two index math (shift/and instead of int div/mod inside the kernel)
assert (N & (N - 1)) == 0 and (NUM_OUT & (NUM_OUT - 1)) == 0
LOG2_N = N.bit_length() - 1
LOG2_OUT = NUM_OUT.bit_length() - 1


# ---------------------------------------------------------------------------
# Fused Pallas kernel: BN -> normalize_A -> cheby adj -> graph conv -> flatten -> MLP
# ---------------------------------------------------------------------------
def dgcnn_kernel(x_ref, a_ref, gamma_ref, beta_ref, w_gc_ref,
                 w1_ref, b1_ref, w2_ref, b2_ref, out_ref):
    f32 = jnp.float32

    # --- BatchNorm1d(F_IN): training-mode batch stats over the (B, N) rows, fused scale/shift
    x = x_ref[...]                                            # (B*N, F)
    mean = jnp.mean(x, axis=0, keepdims=True)                 # (1, F)
    var = jnp.mean((x - mean) ** 2, axis=0, keepdims=True)    # (1, F), biased variance
    scale = gamma_ref[...] * jax.lax.rsqrt(var + BN_EPS)
    shift = beta_ref[...] - mean * scale
    xn = x * scale + shift                                    # (B*N, F)

    # --- normalize_A: L = D^-1/2 relu(A) D^-1/2 via broadcast scaling (no diag matmuls)
    a = jnp.maximum(a_ref[...], 0.0)                          # (N, N)
    dinv = jax.lax.rsqrt(jnp.sum(a, axis=1, keepdims=True) + NORM_EPS)   # (N, 1)
    row_i = jax.lax.broadcasted_iota(jnp.int32, (N, N), 0)
    col_i = jax.lax.broadcasted_iota(jnp.int32, (N, N), 1)
    eye = (row_i == col_i).astype(f32)                        # (N, N)
    dinv_row = jnp.sum(eye * dinv, axis=0, keepdims=True)     # (1, N) == dinv "transposed"
    L = dinv * a * dinv_row                                   # (N, N)

    # --- generate_cheby_adj: [I, L, L@L, ...] stacked along sublanes -> (K*N, N)
    supports = [eye]
    if K > 1:
        supports.append(L)
    for _ in range(2, K):
        supports.append(jnp.dot(supports[-1], L, preferred_element_type=f32))
    adj_stack = jnp.concatenate(supports, axis=0)             # (K*N, N)

    # --- Chebyshev graph conv: h = relu( sum_k adj_k @ x_b @ W_k ), whole batch at once
    u = [jnp.dot(adj_stack, xn[b * N:(b + 1) * N, :],         # one (K*N,N)@(N,F) per batch
                 preferred_element_type=f32) for b in range(B)]
    h = jnp.zeros((B * N, NUM_OUT), f32)
    for k in range(K):
        uk = jnp.concatenate([u[b][k * N:(k + 1) * N, :] for b in range(B)], axis=0)  # (B*N, F)
        h = h + jnp.dot(uk, w_gc_ref[k], preferred_element_type=f32)                  # (B*N, NUM_OUT)
    h = jnp.maximum(h, 0.0)                                   # (B*N, NUM_OUT)

    # --- flatten to (B, N*NUM_OUT) row-major (feat[b, n*O+o] = h[b*N+n, o]) with iota-mask
    #     matmuls; keeps everything lane-dense and avoids an unaligned in-kernel reshape.
    o_r = jax.lax.broadcasted_iota(jnp.int32, (NUM_OUT, N * NUM_OUT), 0)
    o_c = jax.lax.broadcasted_iota(jnp.int32, (NUM_OUT, N * NUM_OUT), 1)
    spread = (o_r == (o_c & (NUM_OUT - 1))).astype(f32)       # (O, N*O): o == c mod O
    ht = jnp.dot(h, spread, preferred_element_type=f32)       # (B*N, N*O): ht[r,c] = h[r, c mod O]
    m_r = jax.lax.broadcasted_iota(jnp.int32, (B * N, N * NUM_OUT), 0)
    m_c = jax.lax.broadcasted_iota(jnp.int32, (B * N, N * NUM_OUT), 1)
    keep = ((m_r & (N - 1)) == (m_c >> LOG2_OUT)).astype(f32)  # (B*N, N*O): n == c // O
    s_b = jax.lax.broadcasted_iota(jnp.int32, (B, B * N), 0)
    s_r = jax.lax.broadcasted_iota(jnp.int32, (B, B * N), 1)
    sel = ((s_r >> LOG2_N) == s_b).astype(f32)                # (B, B*N): batch-row selector
    feat = jnp.dot(sel, ht * keep, preferred_element_type=f32)   # (B, N*NUM_OUT), lane-dense

    # --- fc1 + ReLU + fc2
    z = jnp.maximum(jnp.dot(feat, w1_ref[...], preferred_element_type=f32) + b1_ref[...], 0.0)
    out_ref[...] = jnp.dot(z, w2_ref[...], preferred_element_type=f32) + b2_ref[...]


# ---------------------------------------------------------------------------
# Wrapper: one pallas_call, no grid, everything resident in VMEM
# ---------------------------------------------------------------------------
_VMEM = pl.BlockSpec(memory_space=pltpu.MemorySpace.VMEM)


def dgcnn_forward(x, params):
    x2 = x.reshape(B * N, F_IN)                       # contiguous row-major: metadata-only reshape
    gamma = params["bn_gamma"].reshape(1, F_IN)
    beta = params["bn_beta"].reshape(1, F_IN)
    return pl.pallas_call(
        dgcnn_kernel,
        out_shape=jax.ShapeDtypeStruct((B, NCLASS), jnp.float32),
        in_specs=[_VMEM] * 9,
        out_specs=_VMEM,
    )(x2, params["A"], gamma, beta, params["gc_w"],
      params["w1"], params["b1"], params["w2"], params["b2"])


# ---------------------------------------------------------------------------
# Pure-JAX reference (PyTorch semantics, for validation)
# ---------------------------------------------------------------------------
def dgcnn_reference(x, params):
    mean = jnp.mean(x, axis=(0, 1))
    var = jnp.mean((x - mean) ** 2, axis=(0, 1))
    xn = (x - mean) / jnp.sqrt(var + BN_EPS) * params["bn_gamma"] + params["bn_beta"]
    a = jnp.maximum(params["A"], 0.0)
    d = jnp.sum(a, axis=1)
    dinv = 1.0 / jnp.sqrt(d + NORM_EPS)
    L = dinv[:, None] * a * dinv[None, :]
    sup = [jnp.eye(N, dtype=jnp.float32), L]
    for _ in range(2, K):
        sup.append(sup[-1] @ L)
    h = jnp.zeros((B, N, NUM_OUT), jnp.float32)
    for k in range(K):
        h = h + jnp.einsum("nm,bmf,fo->bno", sup[k], xn, params["gc_w"][k])
    h = jnp.maximum(h, 0.0)
    feat = h.reshape(B, -1)
    z = jnp.maximum(feat @ params["w1"] + params["b1"][0], 0.0)
    return z @ params["w2"] + params["b2"][0]


# ---------------------------------------------------------------------------
# Deterministic parameter init (synthetic, xavier-normal-style)
# ---------------------------------------------------------------------------
def xavier_normal(key, shape, fan_in, fan_out):
    std = float(np.sqrt(2.0 / (fan_in + fan_out)))
    return std * jax.random.normal(key, shape, dtype=jnp.float32)


def make_params():
    key = jax.random.PRNGKey(0)
    k_a, k_gc, k_w1, k_w2 = jax.random.split(key, 4)
    return {
        "A": xavier_normal(k_a, (N, N), N, N),                               # learnable adjacency
        "gc_w": xavier_normal(k_gc, (K, F_IN, NUM_OUT), F_IN, NUM_OUT),      # K GraphConvolution weights
        "w1": xavier_normal(k_w1, (N * NUM_OUT, HIDDEN), N * NUM_OUT, HIDDEN),
        "b1": jnp.zeros((1, HIDDEN), jnp.float32),
        "w2": xavier_normal(k_w2, (HIDDEN, NCLASS), HIDDEN, NCLASS),
        "b2": jnp.zeros((1, NCLASS), jnp.float32),
        "bn_gamma": jnp.ones((F_IN,), jnp.float32),
        "bn_beta": jnp.zeros((F_IN,), jnp.float32),
    }


if __name__ == "__main__":
    params = make_params()
    x = jax.random.normal(jax.random.PRNGKey(1), (B, N, F_IN), dtype=jnp.float32)

    out = jax.jit(dgcnn_forward)(x, params)
    out = jax.block_until_ready(out)

    assert out.shape == (B, NCLASS), out.shape
    ref = np.asarray(dgcnn_reference(x, params))
    if not np.allclose(np.asarray(out), ref, rtol=2e-2, atol=2e-2):
        raise AssertionError(f"mismatch\npallas={np.asarray(out)}\nref={ref}")
    # TODO(synk): the Chebynet dropout argument is unused in the reference forward; omitted here too.
    print("KERNEL_OK")
</pallas_src>

<mosaic_0001>
module attributes {stable_mosaic.version = 11 : i64} {
  func.func @dgcnn_kernel(%arg0: memref<32x16xf32, #tpu.memory_space<vmem>>, %arg1: memref<16x16xf32, #tpu.memory_space<vmem>>, %arg2: memref<1x16xf32, #tpu.memory_space<vmem>>, %arg3: memref<1x16xf32, #tpu.memory_space<vmem>>, %arg4: memref<3x16x32xf32, #tpu.memory_space<vmem>>, %arg5: memref<512x64xf32, #tpu.memory_space<vmem>>, %arg6: memref<1x64xf32, #tpu.memory_space<vmem>>, %arg7: memref<64x3xf32, #tpu.memory_space<vmem>>, %arg8: memref<1x3xf32, #tpu.memory_space<vmem>>, %arg9: memref<2x3xf32, #tpu.memory_space<vmem>>) attributes {dimension_semantics = [], scalar_prefetch = 0 : i64, scratch_operands = 0 : i64, tpu.core_type = #tpu.core_type<tc>} {
    %c0 = arith.constant 0 : index
    %c0_0 = arith.constant 0 : index
    %0 = vector.load %arg0[%c0, %c0_0] : memref<32x16xf32, #tpu.memory_space<vmem>>, vector<32x16xf32>
    %cst = arith.constant dense<0.000000e+00> : vector<16xf32>
    %1 = vector.multi_reduction <add>, %0, %cst [0] : vector<32x16xf32> to vector<16xf32>
    %2 = vector.shape_cast %1 : vector<16xf32> to vector<1x16xf32>
    %cst_1 = arith.constant 3.200000e+01 : f32
    %3 = vector.broadcast %cst_1 : f32 to vector<1x16xf32>
    %4 = arith.divf %2, %3 : vector<1x16xf32>
    %5 = vector.broadcast %4 : vector<1x16xf32> to vector<32x16xf32>
    %6 = arith.subf %0, %5 : vector<32x16xf32>
    %7 = arith.mulf %6, %6 : vector<32x16xf32>
    %cst_2 = arith.constant dense<0.000000e+00> : vector<16xf32>
    %8 = vector.multi_reduction <add>, %7, %cst_2 [0] : vector<32x16xf32> to vector<16xf32>
    %9 = vector.shape_cast %8 : vector<16xf32> to vector<1x16xf32>
    %cst_3 = arith.constant 3.200000e+01 : f32
    %10 = vector.broadcast %cst_3 : f32 to vector<1x16xf32>
    %11 = arith.divf %9, %10 : vector<1x16xf32>
    %c0_4 = arith.constant 0 : index
    %c0_5 = arith.constant 0 : index
    %12 = vector.load %arg2[%c0_4, %c0_5] : memref<1x16xf32, #tpu.memory_space<vmem>>, vector<1x16xf32>
    %cst_6 = arith.constant 9.99999974E-6 : f32
    %13 = vector.broadcast %cst_6 : f32 to vector<1x16xf32>
    %14 = arith.addf %11, %13 : vector<1x16xf32>
    %15 = math.rsqrt %14 : vector<1x16xf32>
    %16 = arith.mulf %12, %15 : vector<1x16xf32>
    %c0_7 = arith.constant 0 : index
    %c0_8 = arith.constant 0 : index
    %17 = vector.load %arg3[%c0_7, %c0_8] : memref<1x16xf32, #tpu.memory_space<vmem>>, vector<1x16xf32>
    %18 = arith.mulf %4, %16 : vector<1x16xf32>
    %19 = arith.subf %17, %18 : vector<1x16xf32>
    %20 = vector.broadcast %16 : vector<1x16xf32> to vector<32x16xf32>
    %21 = arith.mulf %0, %20 : vector<32x16xf32>
    %22 = vector.broadcast %19 : vector<1x16xf32> to vector<32x16xf32>
    %23 = arith.addf %21, %22 : vector<32x16xf32>
    %c0_9 = arith.constant 0 : index
    %c0_10 = arith.constant 0 : index
    %24 = vector.load %arg1[%c0_9, %c0_10] : memref<16x16xf32, #tpu.memory_space<vmem>>, vector<16x16xf32>
    %cst_11 = arith.constant 0.000000e+00 : f32
    %25 = vector.broadcast %cst_11 : f32 to vector<16x16xf32>
    %26 = arith.maximumf %24, %25 : vector<16x16xf32>
    %cst_12 = arith.constant dense<0.000000e+00> : vector<16xf32>
    %27 = vector.multi_reduction <add>, %26, %cst_12 [1] : vector<16x16xf32> to vector<16xf32>
    %28 = vector.shape_cast %27 : vector<16xf32> to vector<16x1xf32>
    %cst_13 = arith.constant 1.000000e-10 : f32
    %29 = vector.broadcast %cst_13 : f32 to vector<16x1xf32>
    %30 = arith.addf %28, %29 : vector<16x1xf32>
    %31 = math.rsqrt %30 : vector<16x1xf32>
    %32 = tpu.iota {dimensions = array<i32: 0>} : vector<16x16xi32>
    %33 = tpu.iota {dimensions = array<i32: 1>} : vector<16x16xi32>
    %34 = arith.cmpi eq, %32, %33 : vector<16x16xi32>
    %35 = arith.extui %34 : vector<16x16xi1> to vector<16x16xi32>
    %36 = arith.sitofp %35 : vector<16x16xi32> to vector<16x16xf32>
    %37 = vector.broadcast %31 : vector<16x1xf32> to vector<16x16xf32>
    %38 = arith.mulf %36, %37 : vector<16x16xf32>
    %cst_14 = arith.constant dense<0.000000e+00> : vector<16xf32>
    %39 = vector.multi_reduction <add>, %38, %cst_14 [0] : vector<16x16xf32> to vector<16xf32>
    %40 = vector.shape_cast %39 : vector<16xf32> to vector<1x16xf32>
    %41 = vector.broadcast %31 : vector<16x1xf32> to vector<16x16xf32>
    %42 = arith.mulf %41, %26 : vector<16x16xf32>
    %43 = vector.broadcast %40 : vector<1x16xf32> to vector<16x16xf32>
    %44 = arith.mulf %42, %43 : vector<16x16xf32>
    %cst_15 = arith.constant dense<0.000000e+00> : vector<16x16xf32>
    %45 = tpu.matmul %44, %44, %cst_15 {dimension_numbers = #tpu.dot_dimension_numbers<[1], [0], [0], [1], [0, 0, 1, 1], [], []>} : vector<16x16xf32>, vector<16x16xf32>, vector<16x16xf32> -> vector<16x16xf32>
    %46 = tpu.concatenate %36, %44, %45 in 0 : vector<16x16xf32>, vector<16x16xf32>, vector<16x16xf32> -> vector<48x16xf32>
    %47 = vector.extract_strided_slice %23 {offsets = [0, 0], sizes = [16, 16], strides = [1, 1]} : vector<32x16xf32> to vector<16x16xf32>
    %cst_16 = arith.constant dense<0.000000e+00> : vector<48x16xf32>
    %48 = tpu.matmul %46, %47, %cst_16 {dimension_numbers = #tpu.dot_dimension_numbers<[1], [0], [0], [1], [0, 0, 1, 1], [], []>} : vector<48x16xf32>, vector<16x16xf32>, vector<48x16xf32> -> vector<48x16xf32>
    %49 = vector.extract_strided_slice %23 {offsets = [16, 0], sizes = [16, 16], strides = [1, 1]} : vector<32x16xf32> to vector<16x16xf32>
    %cst_17 = arith.constant dense<0.000000e+00> : vector<48x16xf32>
    %50 = tpu.matmul %46, %49, %cst_17 {dimension_numbers = #tpu.dot_dimension_numbers<[1], [0], [0], [1], [0, 0, 1, 1], [], []>} : vector<48x16xf32>, vector<16x16xf32>, vector<48x16xf32> -> vector<48x16xf32>
    %cst_18 = arith.constant 0.000000e+00 : f32
    %51 = vector.broadcast %cst_18 : f32 to vector<32x32xf32>
    %52 = vector.extract_strided_slice %48 {offsets = [0, 0], sizes = [16, 16], strides = [1, 1]} : vector<48x16xf32> to vector<16x16xf32>
    %53 = vector.extract_strided_slice %50 {offsets = [0, 0], sizes = [16, 16], strides = [1, 1]} : vector<48x16xf32> to vector<16x16xf32>
    %54 = tpu.concatenate %52, %53 in 0 : vector<16x16xf32>, vector<16x16xf32> -> vector<32x16xf32>
    %c0_19 = arith.constant 0 : index
    %c0_20 = arith.constant 0 : index
    %c0_21 = arith.constant 0 : index
    %55 = vector.load %arg4[%c0_19, %c0_20, %c0_21] : memref<3x16x32xf32, #tpu.memory_space<vmem>>, vector<1x16x32xf32>
    %56 = vector.shape_cast %55 : vector<1x16x32xf32> to vector<16x32xf32>
    %cst_22 = arith.constant dense<0.000000e+00> : vector<32x32xf32>
    %57 = tpu.matmul %54, %56, %cst_22 {dimension_numbers = #tpu.dot_dimension_numbers<[1], [0], [0], [1], [0, 0, 1, 1], [], []>} : vector<32x16xf32>, vector<16x32xf32>, vector<32x32xf32> -> vector<32x32xf32>
    %58 = arith.addf %51, %57 : vector<32x32xf32>
    %59 = vector.extract_strided_slice %48 {offsets = [16, 0], sizes = [16, 16], strides = [1, 1]} : vector<48x16xf32> to vector<16x16xf32>
    %60 = vector.extract_strided_slice %50 {offsets = [16, 0], sizes = [16, 16], strides = [1, 1]} : vector<48x16xf32> to vector<16x16xf32>
    %61 = tpu.concatenate %59, %60 in 0 : vector<16x16xf32>, vector<16x16xf32> -> vector<32x16xf32>
    %c1 = arith.constant 1 : index
    %c0_23 = arith.constant 0 : index
    %c0_24 = arith.constant 0 : index
    %62 = vector.load %arg4[%c1, %c0_23, %c0_24] : memref<3x16x32xf32, #tpu.memory_space<vmem>>, vector<1x16x32xf32>
    %63 = vector.shape_cast %62 : vector<1x16x32xf32> to vector<16x32xf32>
    %cst_25 = arith.constant dense<0.000000e+00> : vector<32x32xf32>
    %64 = tpu.matmul %61, %63, %cst_25 {dimension_numbers = #tpu.dot_dimension_numbers<[1], [0], [0], [1], [0, 0, 1, 1], [], []>} : vector<32x16xf32>, vector<16x32xf32>, vector<32x32xf32> -> vector<32x32xf32>
    %65 = arith.addf %58, %64 : vector<32x32xf32>
    %66 = vector.extract_strided_slice %48 {offsets = [32, 0], sizes = [16, 16], strides = [1, 1]} : vector<48x16xf32> to vector<16x16xf32>
    %67 = vector.extract_strided_slice %50 {offsets = [32, 0], sizes = [16, 16], strides = [1, 1]} : vector<48x16xf32> to vector<16x16xf32>
    %68 = tpu.concatenate %66, %67 in 0 : vector<16x16xf32>, vector<16x16xf32> -> vector<32x16xf32>
    %c2 = arith.constant 2 : index
    %c0_26 = arith.constant 0 : index
    %c0_27 = arith.constant 0 : index
    %69 = vector.load %arg4[%c2, %c0_26, %c0_27] : memref<3x16x32xf32, #tpu.memory_space<vmem>>, vector<1x16x32xf32>
    %70 = vector.shape_cast %69 : vector<1x16x32xf32> to vector<16x32xf32>
    %cst_28 = arith.constant dense<0.000000e+00> : vector<32x32xf32>
    %71 = tpu.matmul %68, %70, %cst_28 {dimension_numbers = #tpu.dot_dimension_numbers<[1], [0], [0], [1], [0, 0, 1, 1], [], []>} : vector<32x16xf32>, vector<16x32xf32>, vector<32x32xf32> -> vector<32x32xf32>
    %72 = arith.addf %65, %71 : vector<32x32xf32>
    %cst_29 = arith.constant 0.000000e+00 : f32
    %73 = vector.broadcast %cst_29 : f32 to vector<32x32xf32>
    %74 = arith.maximumf %72, %73 : vector<32x32xf32>
    %75 = tpu.iota {dimensions = array<i32: 0>} : vector<32x512xi32>
    %76 = tpu.iota {dimensions = array<i32: 1>} : vector<32x512xi32>
    %c31_i32 = arith.constant 31 : i32
    %77 = vector.broadcast %c31_i32 : i32 to vector<32x512xi32>
    %78 = arith.andi %76, %77 : vector<32x512xi32>
    %79 = arith.cmpi eq, %75, %78 : vector<32x512xi32>
    %80 = arith.extui %79 : vector<32x512xi1> to vector<32x512xi32>
    %81 = arith.sitofp %80 : vector<32x512xi32> to vector<32x512xf32>
    %cst_30 = arith.constant dense<0.000000e+00> : vector<32x512xf32>
    %82 = tpu.matmul %74, %81, %cst_30 {dimension_numbers = #tpu.dot_dimension_numbers<[1], [0], [0], [1], [0, 0, 1, 1], [], []>} : vector<32x32xf32>, vector<32x512xf32>, vector<32x512xf32> -> vector<32x512xf32>
    %83 = tpu.iota {dimensions = array<i32: 0>} : vector<32x512xi32>
    %84 = tpu.iota {dimensions = array<i32: 1>} : vector<32x512xi32>
    %c15_i32 = arith.constant 15 : i32
    %85 = vector.broadcast %c15_i32 : i32 to vector<32x512xi32>
    %86 = arith.andi %83, %85 : vector<32x512xi32>
    %c5_i32 = arith.constant 5 : i32
    %87 = vector.broadcast %c5_i32 : i32 to vector<32x512xi32>
    %88 = arith.shrsi %84, %87 : vector<32x512xi32>
    %89 = arith.cmpi eq, %86, %88 : vector<32x512xi32>
    %90 = arith.extui %89 : vector<32x512xi1> to vector<32x512xi32>
    %91 = arith.sitofp %90 : vector<32x512xi32> to vector<32x512xf32>
    %92 = tpu.iota {dimensions = array<i32: 0>} : vector<2x32xi32>
    %93 = tpu.iota {dimensions = array<i32: 1>} : vector<2x32xi32>
    %c4_i32 = arith.constant 4 : i32
    %94 = vector.broadcast %c4_i32 : i32 to vector<2x32xi32>
    %95 = arith.shrsi %93, %94 : vector<2x32xi32>
    %96 = arith.cmpi eq, %95, %92 : vector<2x32xi32>
    %97 = arith.extui %96 : vector<2x32xi1> to vector<2x32xi32>
    %98 = arith.sitofp %97 : vector<2x32xi32> to vector<2x32xf32>
    %99 = arith.mulf %82, %91 : vector<32x512xf32>
    %cst_31 = arith.constant dense<0.000000e+00> : vector<2x512xf32>
    %100 = tpu.matmul %98, %99, %cst_31 {dimension_numbers = #tpu.dot_dimension_numbers<[1], [0], [0], [1], [0, 0, 1, 1], [], []>} : vector<2x32xf32>, vector<32x512xf32>, vector<2x512xf32> -> vector<2x512xf32>
    %c0_32 = arith.constant 0 : index
    %c0_33 = arith.constant 0 : index
    %101 = vector.load %arg5[%c0_32, %c0_33] : memref<512x64xf32, #tpu.memory_space<vmem>>, vector<512x64xf32>
    %cst_34 = arith.constant dense<0.000000e+00> : vector<2x64xf32>
    %102 = tpu.matmul %100, %101, %cst_34 {dimension_numbers = #tpu.dot_dimension_numbers<[1], [0], [0], [1], [0, 0, 1, 1], [], []>} : vector<2x512xf32>, vector<512x64xf32>, vector<2x64xf32> -> vector<2x64xf32>
    %c0_35 = arith.constant 0 : index
    %c0_36 = arith.constant 0 : index
    %103 = vector.load %arg6[%c0_35, %c0_36] : memref<1x64xf32, #tpu.memory_space<vmem>>, vector<1x64xf32>
    %104 = vector.broadcast %103 : vector<1x64xf32> to vector<2x64xf32>
    %105 = arith.addf %102, %104 : vector<2x64xf32>
    %cst_37 = arith.constant 0.000000e+00 : f32
    %106 = vector.broadcast %cst_37 : f32 to vector<2x64xf32>
    %107 = arith.maximumf %105, %106 : vector<2x64xf32>
    %c0_38 = arith.constant 0 : index
    %c0_39 = arith.constant 0 : index
    %108 = vector.load %arg7[%c0_38, %c0_39] : memref<64x3xf32, #tpu.memory_space<vmem>>, vector<64x3xf32>
    %cst_40 = arith.constant dense<0.000000e+00> : vector<2x3xf32>
    %109 = tpu.matmul %107, %108, %cst_40 {dimension_numbers = #tpu.dot_dimension_numbers<[1], [0], [0], [1], [0, 0, 1, 1], [], []>} : vector<2x64xf32>, vector<64x3xf32>, vector<2x3xf32> -> vector<2x3xf32>
    %c0_41 = arith.constant 0 : index
    %c0_42 = arith.constant 0 : index
    %110 = vector.load %arg8[%c0_41, %c0_42] : memref<1x3xf32, #tpu.memory_space<vmem>>, vector<1x3xf32>
    %111 = vector.broadcast %110 : vector<1x3xf32> to vector<2x3xf32>
    %112 = arith.addf %109, %111 : vector<2x3xf32>
    %c0_43 = arith.constant 0 : index
    %c0_44 = arith.constant 0 : index
    %113 = vector.load %arg9[%c0_43, %c0_44] : memref<2x3xf32, #tpu.memory_space<vmem>>, vector<2x3xf32>
    tpu.vector_store %arg9[%c0_43, %c0_44], %112 {strides = array<i32>} : memref<2x3xf32, #tpu.memory_space<vmem>>, vector<2x3xf32>,
    return
  }
}

</mosaic_0001>

<llo_original>
// kernel: dgcnn_forward.1
$region0: #{dgcnn_forward.1}
  #allocation0 [shape = 'u32[]', space=smem, size = 0x4, offset = 0x4, fixed_abs, tag = 'smem constant byte address 0x4 - core index']
  #allocation1 [shape = 'u32[72,128]{1,0:T(1,128)}', space=vmem, size = 0x9000, scoped, tag = 'internal scratch']
  %s0 = inlined_call_operand.vmem [shape: f32[32,16], index: 0, kind: input, shape index: {}]
  %s1 = inlined_call_operand.vmem [shape: f32[16,16], index: 1, kind: input, shape index: {}]
  %s2 = inlined_call_operand.vmem [shape: f32[1,16], index: 2, kind: input, shape index: {}]
  %s3 = inlined_call_operand.vmem [shape: f32[1,16], index: 3, kind: input, shape index: {}]
  %s4 = inlined_call_operand.vmem [shape: f32[3,16,32], index: 4, kind: input, shape index: {}]
  %s5 = inlined_call_operand.vmem [shape: f32[512,64], index: 5, kind: input, shape index: {}]
  %s6 = inlined_call_operand.vmem [shape: f32[1,64], index: 6, kind: input, shape index: {}]
  %s7 = inlined_call_operand.vmem [shape: f32[64,3], index: 7, kind: input, shape index: {}]
  %s8 = inlined_call_operand.vmem [shape: f32[1,3], index: 8, kind: input, shape index: {}]
  %s9 = inlined_call_operand.hbm [shape: f32[2,3], index: 9, kind: output, shape index: {}]
  %s10 = sld [smem:[#allocation0]]
  $region46: #{dgcnn_forward.1} parent=0
    _
  %s12 = ssub.s32 1, %s10
  %s13 = scalar_select 0, %s12, %s10
  $region1: #{dgcnn_forward.1} parent=0
    #allocation2 [shape = 'u8[1024]{0}', space=vmem, size = 0x400, scoped, tag = 'output window, operand 0, single buffered']
    #allocation3 [shape = 's32[1]{0}', space=sflag, size = 0x4, scoped, tag = 'scoped memory for dgcnn_forward.1']
    %14 = vsyncpa [#allocation3], 0
    // Predicated region
    $region2: #{dgcnn_forward.1} parent=1 // pred_check
      _
    $region3: #{dgcnn_forward.1} parent=1 // pred_check_branch
      %16 = sbr.rel (0) target = $region5
    $region4: #{dgcnn_forward.1} parent=1 // pred_region
      _
    $region5: #{dgcnn_forward.1} parent=1 // pred_fallthru
      _
    // Predicated region
    $region6: #{dgcnn_forward.1} parent=1 // pred_check
      _
    $region7: #{dgcnn_forward.1} parent=1 // pred_check_branch
      %18 = sbr.rel (0) target = $region9
    $region8: #{dgcnn_forward.1} parent=1 // pred_region
      _
    $region9: #{dgcnn_forward.1} parent=1 // pred_fallthru
      _
    // Predicated region
    $region10: #{dgcnn_forward.1} parent=1 // pred_check
      _
    $region11: #{dgcnn_forward.1} parent=1 // pred_check_branch
      %20 = sbr.rel (0) target = $region13
    $region12: #{dgcnn_forward.1} parent=1 // pred_region
      _
    $region13: #{dgcnn_forward.1} parent=1 // pred_fallthru
      _
    // Predicated region
    $region14: #{dgcnn_forward.1} parent=1 // pred_check
      _
    $region15: #{dgcnn_forward.1} parent=1 // pred_check_branch
      %22 = sbr.rel (0) target = $region17
    $region16: #{dgcnn_forward.1} parent=1 // pred_region
      _
    $region17: #{dgcnn_forward.1} parent=1 // pred_fallthru
      _
    // Predicated region
    $region18: #{dgcnn_forward.1} parent=1 // pred_check
      _
    $region19: #{dgcnn_forward.1} parent=1 // pred_check_branch
      %24 = sbr.rel (0) target = $region21
    $region20: #{dgcnn_forward.1} parent=1 // pred_region
      _
    $region21: #{dgcnn_forward.1} parent=1 // pred_fallthru
      _
    // Predicated region
    $region22: #{dgcnn_forward.1} parent=1 // pred_check
      _
    $region23: #{dgcnn_forward.1} parent=1 // pred_check_branch
      %26 = sbr.rel (0) target = $region25
    $region24: #{dgcnn_forward.1} parent=1 // pred_region
      _
    $region25: #{dgcnn_forward.1} parent=1 // pred_fallthru
      _
    // Predicated region
    $region26: #{dgcnn_forward.1} parent=1 // pred_check
      _
    $region27: #{dgcnn_forward.1} parent=1 // pred_check_branch
      %28 = sbr.rel (0) target = $region29
    $region28: #{dgcnn_forward.1} parent=1 // pred_region
      _
    $region29: #{dgcnn_forward.1} parent=1 // pred_fallthru
      _
    // Predicated region
    $region30: #{dgcnn_forward.1} parent=1 // pred_check
      _
    $region31: #{dgcnn_forward.1} parent=1 // pred_check_branch
      %30 = sbr.rel (0) target = $region33
    $region32: #{dgcnn_forward.1} parent=1 // pred_region
      _
    $region33: #{dgcnn_forward.1} parent=1 // pred_fallthru
      _
    // Predicated region
    $region34: #{dgcnn_forward.1} parent=1 // pred_check
      _
    $region35: #{dgcnn_forward.1} parent=1 // pred_check_branch
      %32 = sbr.rel (0) target = $region37
    $region36: #{dgcnn_forward.1} parent=1 // pred_region
      _
    $region37: #{dgcnn_forward.1} parent=1 // pred_fallthru
      _
    %v33 = vld [vmem:[%s0] sm:$0xff]
    %v34 = vld [vmem:[%s0 + $0x8] sm:$0xff]
    %v35 = vld [vmem:[%s0 + $0x10] sm:$0xff]
    %v36 = vld [vmem:[%s0 + $0x18] sm:$0xff]
    %vm37 = vcmask 130048
    %v38 = vsel %vm37, %v33, 0.0
    %v39 = vsel %vm37, %v34, 0.0
    %v40 = vadd.f32 %v38, %v39
    %v41 = vsel %vm37, %v35, 0.0
    %v42 = vadd.f32 %v40, %v41
    %v43 = vsel %vm37, %v36, 0.0
    %v44 = vadd.f32 %v42, %v43
    %v45 = vrot.slane %v44, 4
    %v46 = vadd.f32 %v44, %v45
    %v47 = vrot.slane %v46, 2
    %v48 = vadd.f32 %v46, %v47
    %v49 = vrot.slane %v48, 1
    %v50 = vadd.f32 %v48, %v49
    %v51 = vrcp.pop 32.0
    %v52 = vmul.f32 32.0, %v51
    %v53 = vsub.f32 1.0, %v52
    %v54 = vmul.f32 %v51, %v53
    %v55 = vadd.f32 %v51, %v54
    %vm56 = vweird.f32 %v51
    %v57 = vsel %vm56, %v51, %v55
    %v58 = vmul.f32 %v50, %v57
    %v59 = vsub.f32 %v33, %v58
    %v60 = vsub.f32 %v34, %v58
    %v61 = vsub.f32 %v35, %v58
    %v62 = vsub.f32 %v36, %v58
    %v63 = vmul.f32 %v59, %v59
    %v64 = vmul.f32 %v60, %v60
    %v65 = vmul.f32 %v61, %v61
    %v66 = vmul.f32 %v62, %v62
    %v67 = vsel %vm37, %v63, 0.0
    %v68 = vsel %vm37, %v64, 0.0
    %v69 = vadd.f32 %v67, %v68
    %v70 = vsel %vm37, %v65, 0.0
    %v71 = vadd.f32 %v69, %v70
    %v72 = vsel %vm37, %v66, 0.0
    %v73 = vadd.f32 %v71, %v72
    %v74 = vrot.slane %v73, 4
    %v75 = vadd.f32 %v73, %v74
    %v76 = vrot.slane %v75, 2
    %v77 = vadd.f32 %v75, %v76
    %v78 = vrot.slane %v77, 1
    %v79 = vadd.f32 %v77, %v78
    %v80 = vmul.f32 %v79, %v57
    %v81 = vld [vmem:[%s2] sm:$0x1]
    %v82 = vadd.f32 %v80, 1e-05
    %v83 = vrsqrt.pop %v82
    %v84 = vmul.f32 %v83, %v82
    %v85 = vmul.f32 %v84, %v83
    %v86 = vmul.f32 0.5, %v85
    %v87 = vsub.f32 1.5, %v86
    %v88 = vmul.f32 %v83, %v87
    %vm89 = vweird.f32 %v82
    %vm90 = vweird.f32 %v83
    %vm91 = vmor %vm89, %vm90
    %v92 = vsel %vm91, %v83, %v88
    %v93 = vmul.f32 %v81, %v92
    %v94 = vld [vmem:[%s3] sm:$0x1]
    %v95 = vmul.f32 %v58, %v93
    %v96 = vsub.f32 %v94, %v95
    %v98 = vperm.slane %v93, 0
    %v100 = vmul.f32 %v33, %v98
    %v101 = vmul.f32 %v34, %v98
    %v102 = vmul.f32 %v35, %v98
    %v103 = vmul.f32 %v36, %v98
    %v105 = vperm.slane %v96, 0
    %v107 = vadd.f32 %v100, %v105
    %v108 = vadd.f32 %v101, %v105
    %v109 = vadd.f32 %v102, %v105
    %v110 = vadd.f32 %v103, %v105
    %v111 = vld [vmem:[%s1] sm:$0xff]
    %v112 = vld [vmem:[%s1 + $0x8] sm:$0xff]
    %v113 = vmax.f32 %v111, 0.0
    %v114 = vmax.f32 %v112, 0.0
    %v115 = vsel %vm37, %v113, 0.0
    %116 = vadd.xlane.f32.xlu0 %v115
    %v117 = vpop.xlane.xlu0 %116
    %v118 = vsel %vm37, %v114, 0.0
    %119 = vadd.xlane.f32.xlu0 %v118
    %v120 = vpop.xlane.xlu0 %119
    %v121 = vadd.f32 %v117, 1e-10
    %v122 = vadd.f32 %v120, 1e-10
    %v123 = vrsqrt.pop %v121
    %v124 = vmul.f32 %v123, %v121
    %v125 = vmul.f32 %v124, %v123
    %v126 = vmul.f32 0.5, %v125
    %v127 = vsub.f32 1.5, %v126
    %v128 = vmul.f32 %v123, %v127
    %vm129 = vweird.f32 %v121
    %vm130 = vweird.f32 %v123
    %vm131 = vmor %vm129, %vm130
    %v132 = vsel %vm131, %v123, %v128
    %v133 = vrsqrt.pop %v122
    %v134 = vmul.f32 %v133, %v122
    %v135 = vmul.f32 %v134, %v133
    %v136 = vmul.f32 0.5, %v135
    %v137 = vsub.f32 1.5, %v136
    %v138 = vmul.f32 %v133, %v137
    %vm139 = vweird.f32 %v122
    %vm140 = vweird.f32 %v133
    %vm141 = vmor %vm139, %vm140
    %v142 = vsel %vm141, %v133, %v138
    %v143 = vlaneseq
    %v144 = vshrl.u32 %v143, 7
    %v145 = vadd.s32 %v144, 8
    %v146 = vlaneseq
    %v147 = vand.u32 %v146, 127
    %vm148 = vcmp.eq.s32.totalorder %v144, %v147
    %vm149 = vcmp.eq.s32.totalorder %v145, %v147
    %v150 = vsel %vm148, 1, 0
    %v151 = vsel %vm149, 1, 0
    %v152 = vcvt.s32.f32 %v150
    %v153 = vcvt.s32.f32 %v151
    %v154 = vmul.f32 %v152, %v132
    %v155 = vmul.f32 %v153, %v142
    %v156 = vsel %vm37, %v154, 0.0
    %v157 = vsel %vm37, %v155, 0.0
    %v158 = vadd.f32 %v156, %v157
    %v159 = vrot.slane %v158, 4
    %v160 = vadd.f32 %v158, %v159
    %v161 = vrot.slane %v160, 2
    %v162 = vadd.f32 %v160, %v161
    %v163 = vrot.slane %v162, 1
    %v164 = vadd.f32 %v162, %v163
    %v165 = vmul.f32 %v132, %v113
    %v166 = vmul.f32 %v142, %v114
    %v167 = vmul.f32 %v165, %v164
    %v168 = vmul.f32 %v166, %v164
    %v170 = vsel %vm37, %v167, 0
    %v173 = vsel %vm37, %v168, 0
    %175 = vmatpush.msra.mxu0 0.0
    %176 = vmatpush.msra.mxu0 0.0
    %177 = vmatpush.msra.mxu0 0.0
    %178 = vmatpush.msra.mxu0 0.0
    %179 = vmatpush.msra.mxu0 0.0
    %180 = vmatpush.msra.mxu0 0.0
    %181 = vmatpush.msra.mxu0 0.0
    %182 = vmatpush.msra.mxu0 0.0
    %183 = vmatpush.msra.mxu0 0.0
    %184 = vmatpush.msra.mxu0 0.0
    %185 = vmatpush.msra.mxu0 0.0
    %186 = vmatpush.msra.mxu0 0.0
    %187 = vmatpush.msra.mxu0 0.0
    %188 = vmatpush.msra.mxu0 0.0
    %189 = vmatpush.msra.mxu0 %v168
    %190 = vmatpush.msra.mxu0 %v167
    %191 = vmatmul.f32.gmra.mxu0 %v170
    %v192 = vpop.f32.mrf.mxu0
    %v193 = vadd.f32 0.0, %v192
    %194 = vmatmul.f32.gmra.mxu0 %v173
    %v195 = vpop.f32.mrf.mxu0
    %v196 = vadd.f32 0.0, %v195
    %197 = vdwg.mxu0
    %v199 = vsel %vm37, %v152, 0
    %v202 = vsel %vm37, %v153, 0
    %v205 = vsel %vm37, %v193, 0
    %v208 = vsel %vm37, %v196, 0
    %210 = vmatpush.msra.mxu0 0.0
    %211 = vmatpush.msra.mxu0 0.0
    %212 = vmatpush.msra.mxu0 0.0
    %213 = vmatpush.msra.mxu0 0.0
    %214 = vmatpush.msra.mxu0 0.0
    %215 = vmatpush.msra.mxu0 0.0
    %216 = vmatpush.msra.mxu0 0.0
    %217 = vmatpush.msra.mxu0 0.0
    %218 = vmatpush.msra.mxu0 0.0
    %219 = vmatpush.msra.mxu0 0.0
    %220 = vmatpush.msra.mxu0 0.0
    %221 = vmatpush.msra.mxu0 0.0
    %222 = vmatpush.msra.mxu0 0.0
    %223 = vmatpush.msra.mxu0 0.0
    %224 = vmatpush.msra.mxu0 %v108
    %225 = vmatpush.msra.mxu0 %v107
    %226 = vmatmul.f32.gmra.mxu0 %v199
    %v227 = vpop.f32.mrf.mxu0
    %v228 = vadd.f32 0.0, %v227
    %229 = vmatmul.f32.gmra.mxu0 %v202
    %v230 = vpop.f32.mrf.mxu0
    %v231 = vadd.f32 0.0, %v230
    %232 = vmatmul.f32.gmra.mxu0 %v170
    %v233 = vpop.f32.mrf.mxu0
    %v234 = vadd.f32 0.0, %v233
    %235 = vmatmul.f32.gmra.mxu0 %v173
    %v236 = vpop.f32.mrf.mxu0
    %v237 = vadd.f32 0.0, %v236
    %238 = vmatmul.f32.gmra.mxu0 %v205
    %v239 = vpop.f32.mrf.mxu0
    %v240 = vadd.f32 0.0, %v239
    %241 = vmatmul.f32.gmra.mxu0 %v208
    %v242 = vpop.f32.mrf.mxu0
    %v243 = vadd.f32 0.0, %v242
    %244 = vdwg.mxu0
    %245 = vmatpush.msra.mxu0 0.0
    %246 = vmatpush.msra.mxu0 0.0
    %247 = vmatpush.msra.mxu0 0.0
    %248 = vmatpush.msra.mxu0 0.0
    %249 = vmatpush.msra.mxu0 0.0
    %250 = vmatpush.msra.mxu0 0.0
    %251 = vmatpush.msra.mxu0 0.0
    %252 = vmatpush.msra.mxu0 0.0
    %253 = vmatpush.msra.mxu0 0.0
    %254 = vmatpush.msra.mxu0 0.0
    %255 = vmatpush.msra.mxu0 0.0
    %256 = vmatpush.msra.mxu0 0.0
    %257 = vmatpush.msra.mxu0 0.0
    %258 = vmatpush.msra.mxu0 0.0
    %259 = vmatpush.msra.mxu0 %v110
    %260 = vmatpush.msra.mxu0 %v109
    %261 = vmatmul.f32.gmra.mxu0 %v199
    %v262 = vpop.f32.mrf.mxu0
    %v263 = vadd.f32 0.0, %v262
    %264 = vmatmul.f32.gmra.mxu0 %v202
    %v265 = vpop.f32.mrf.mxu0
    %v266 = vadd.f32 0.0, %v265
    %267 = vmatmul.f32.gmra.mxu0 %v170
    %v268 = vpop.f32.mrf.mxu0
    %v269 = vadd.f32 0.0, %v268
    %270 = vmatmul.f32.gmra.mxu0 %v173
    %v271 = vpop.f32.mrf.mxu0
    %v272 = vadd.f32 0.0, %v271
    %273 = vmatmul.f32.gmra.mxu0 %v205
    %v274 = vpop.f32.mrf.mxu0
    %v275 = vadd.f32 0.0, %v274
    %276 = vmatmul.f32.gmra.mxu0 %v208
    %v277 = vpop.f32.mrf.mxu0
    %v278 = vadd.f32 0.0, %v277
    %279 = vdwg.mxu0
    %v280 = vld [vmem:[%s4] sm:$0xff]
    %v281 = vld [vmem:[%s4 + $0x8] sm:$0xff]
    %s282 = scalar_lea.vmem %s4, 16
    %v283 = vld [vmem:[%s282] sm:$0xff]
    %v284 = vld [vmem:[%s282 + $0x8] sm:$0xff]
    %v286 = vsel %vm37, %v234, 0
    %v289 = vsel %vm37, %v237, 0
    %v292 = vsel %vm37, %v269, 0
    %v295 = vsel %vm37, %v272, 0
    %297 = vmatpush.msra.mxu0 0.0
    %298 = vmatpush.msra.mxu0 0.0
    %299 = vmatpush.msra.mxu0 0.0
    %300 = vmatpush.msra.mxu0 0.0
    %301 = vmatpush.msra.mxu0 0.0
    %302 = vmatpush.msra.mxu0 0.0
    %303 = vmatpush.msra.mxu0 0.0
    %304 = vmatpush.msra.mxu0 0.0
    %305 = vmatpush.msra.mxu0 0.0
    %306 = vmatpush.msra.mxu0 0.0
    %307 = vmatpush.msra.mxu0 0.0
    %308 = vmatpush.msra.mxu0 0.0
    %309 = vmatpush.msra.mxu0 0.0
    %310 = vmatpush.msra.mxu0 0.0
    %311 = vmatpush.msra.mxu0 %v284
    %312 = vmatpush.msra.mxu0 %v283
    %313 = vmatmul.f32.gmra.mxu0 %v286
    %v314 = vpop.f32.mrf.mxu0
    %v315 = vadd.f32 0.0, %v314
    %316 = vmatmul.f32.gmra.mxu0 %v289
    %v317 = vpop.f32.mrf.mxu0
    %v318 = vadd.f32 0.0, %v317
    %319 = vmatmul.f32.gmra.mxu0 %v292
    %v320 = vpop.f32.mrf.mxu0
    %v321 = vadd.f32 0.0, %v320
    %322 = vmatmul.f32.gmra.mxu0 %v295
    %v323 = vpop.f32.mrf.mxu0
    %v324 = vadd.f32 0.0, %v323
    %325 = vdwg.mxu0
    %v327 = vsel %vm37, %v228, 0
    %v330 = vsel %vm37, %v231, 0
    %v333 = vsel %vm37, %v263, 0
    %v336 = vsel %vm37, %v266, 0
    %338 = vmatpush.msra.mxu0 0.0
    %339 = vmatpush.msra.mxu0 0.0
    %340 = vmatpush.msra.mxu0 0.0
    %341 = vmatpush.msra.mxu0 0.0
    %342 = vmatpush.msra.mxu0 0.0
    %343 = vmatpush.msra.mxu0 0.0
    %344 = vmatpush.msra.mxu0 0.0
    %345 = vmatpush.msra.mxu0 0.0
    %346 = vmatpush.msra.mxu0 0.0
    %347 = vmatpush.msra.mxu0 0.0
    %348 = vmatpush.msra.mxu0 0.0
    %349 = vmatpush.msra.mxu0 0.0
    %350 = vmatpush.msra.mxu0 0.0
    %351 = vmatpush.msra.mxu0 0.0
    %352 = vmatpush.msra.mxu0 %v281
    %353 = vmatpush.msra.mxu0 %v280
    %354 = vmatmul.f32.gmra.mxu0 %v327
    %v355 = vpop.f32.mrf.mxu0
    %v356 = vadd.f32 %v315, %v355
    %357 = vmatmul.f32.gmra.mxu0 %v330
    %v358 = vpop.f32.mrf.mxu0
    %v359 = vadd.f32 %v318, %v358
    %360 = vmatmul.f32.gmra.mxu0 %v333
    %v361 = vpop.f32.mrf.mxu0
    %v362 = vadd.f32 %v321, %v361
    %363 = vmatmul.f32.gmra.mxu0 %v336
    %v364 = vpop.f32.mrf.mxu0
    %v365 = vadd.f32 %v324, %v364
    %366 = vdwg.mxu0
    %s367 = scalar_lea.vmem %s4, 32
    %v368 = vld [vmem:[%s367] sm:$0xff]
    %v369 = vld [vmem:[%s367 + $0x8] sm:$0xff]
    %v371 = vsel %vm37, %v240, 0
    %v374 = vsel %vm37, %v243, 0
    %v377 = vsel %vm37, %v275, 0
    %v380 = vsel %vm37, %v278, 0
    %382 = vmatpush.msra.mxu0 0.0
    %383 = vmatpush.msra.mxu0 0.0
    %384 = vmatpush.msra.mxu0 0.0
    %385 = vmatpush.msra.mxu0 0.0
    %386 = vmatpush.msra.mxu0 0.0
    %387 = vmatpush.msra.mxu0 0.0
    %388 = vmatpush.msra.mxu0 0.0
    %389 = vmatpush.msra.mxu0 0.0
    %390 = vmatpush.msra.mxu0 0.0
    %391 = vmatpush.msra.mxu0 0.0
    %392 = vmatpush.msra.mxu0 0.0
    %393 = vmatpush.msra.mxu0 0.0
    %394 = vmatpush.msra.mxu0 0.0
    %395 = vmatpush.msra.mxu0 0.0
    %396 = vmatpush.msra.mxu0 %v369
    %397 = vmatpush.msra.mxu0 %v368
    %398 = vmatmul.f32.gmra.mxu0 %v371
    %v399 = vpop.f32.mrf.mxu0
    %v400 = vadd.f32 0.0, %v399
    %401 = vmatmul.f32.gmra.mxu0 %v374
    %v402 = vpop.f32.mrf.mxu0
    %v403 = vadd.f32 0.0, %v402
    %404 = vmatmul.f32.gmra.mxu0 %v377
    %v405 = vpop.f32.mrf.mxu0
    %v406 = vadd.f32 0.0, %v405
    %407 = vmatmul.f32.gmra.mxu0 %v380
    %v408 = vpop.f32.mrf.mxu0
    %v409 = vadd.f32 0.0, %v408
    %410 = vdwg.mxu0
    %v411 = vadd.f32 %v356, %v400
    %v412 = vadd.f32 %v359, %v403
    %v413 = vadd.f32 %v362, %v406
    %v414 = vadd.f32 %v365, %v409
    %v415 = vmax.f32 %v411, 0.0
    %v416 = vmax.f32 %v412, 0.0
    %v417 = vmax.f32 %v413, 0.0
    %v418 = vmax.f32 %v414, 0.0
    %v419 = vadd.s32 %v144, 16
    %v420 = vadd.s32 %v144, 24
    %v421 = vadd.s32 %v147, 128
    %v422 = vadd.s32 %v147, 256
    %v423 = vadd.s32 %v147, 384
    %v424 = vand.u32 %v147, 31
    %v425 = vand.u32 %v421, 31
    %v426 = vand.u32 %v422, 31
    %v427 = vand.u32 %v423, 31
    %vm428 = vcmp.eq.s32.totalorder %v144, %v424
    %vm429 = vcmp.eq.s32.totalorder %v144, %v425
    %vm430 = vcmp.eq.s32.totalorder %v144, %v426
    %vm431 = vcmp.eq.s32.totalorder %v144, %v427
    %vm432 = vcmp.eq.s32.totalorder %v145, %v424
    %vm433 = vcmp.eq.s32.totalorder %v145, %v425
    %vm434 = vcmp.eq.s32.totalorder %v145, %v426
    %vm435 = vcmp.eq.s32.totalorder %v145, %v427
    %vm436 = vcmp.eq.s32.totalorder %v419, %v424
    %vm437 = vcmp.eq.s32.totalorder %v419, %v425
    %vm438 = vcmp.eq.s32.totalorder %v419, %v426
    %vm439 = vcmp.eq.s32.totalorder %v419, %v427
    %vm440 = vcmp.eq.s32.totalorder %v420, %v424
    %vm441 = vcmp.eq.s32.totalorder %v420, %v425
    %vm442 = vcmp.eq.s32.totalorder %v420, %v426
    %vm443 = vcmp.eq.s32.totalorder %v420, %v427
    %v444 = vsel %vm428, 1, 0
    %v445 = vsel %vm429, 1, 0
    %v446 = vsel %vm430, 1, 0
    %v447 = vsel %vm431, 1, 0
    %v448 = vsel %vm432, 1, 0
    %v449 = vsel %vm433, 1, 0
    %v450 = vsel %vm434, 1, 0
    %v451 = vsel %vm435, 1, 0
    %v452 = vsel %vm436, 1, 0
    %v453 = vsel %vm437, 1, 0
    %v454 = vsel %vm438, 1, 0
    %v455 = vsel %vm439, 1, 0
    %v456 = vsel %vm440, 1, 0
    %v457 = vsel %vm441, 1, 0
    %v458 = vsel %vm442, 1, 0
    %v459 = vsel %vm443, 1, 0
    %v460 = vcvt.s32.f32 %v444
    %v461 = vcvt.s32.f32 %v445
    %v462 = vcvt.s32.f32 %v446
    %v463 = vcvt.s32.f32 %v447
    %v464 = vcvt.s32.f32 %v448
    %v465 = vcvt.s32.f32 %v449
    %v466 = vcvt.s32.f32 %v450
    %v467 = vcvt.s32.f32 %v451
    %v468 = vcvt.s32.f32 %v452
    %v469 = vcvt.s32.f32 %v453
    %v470 = vcvt.s32.f32 %v454
    %v471 = vcvt.s32.f32 %v455
    %v472 = vcvt.s32.f32 %v456
    %v473 = vcvt.s32.f32 %v457
    %v474 = vcvt.s32.f32 %v458
    %v475 = vcvt.s32.f32 %v459
    %vm476 = vcmask 261120
    %v478 = vsel %vm476, %v415, 0
    %v481 = vsel %vm476, %v416, 0
    %v484 = vsel %vm476, %v417, 0
    %v487 = vsel %vm476, %v418, 0
    %489 = vmatpush.msra.mxu0 0.0
    %490 = vmatpush.msra.mxu0 0.0
    %491 = vmatpush.msra.mxu0 0.0
    %492 = vmatpush.msra.mxu0 0.0
    %493 = vmatpush.msra.mxu0 0.0
    %494 = vmatpush.msra.mxu0 0.0
    %495 = vmatpush.msra.mxu0 0.0
    %496 = vmatpush.msra.mxu0 0.0
    %497 = vmatpush.msra.mxu0 0.0
    %498 = vmatpush.msra.mxu0 0.0
    %499 = vmatpush.msra.mxu0 0.0
    %500 = vmatpush.msra.mxu0 0.0
    %501 = vmatpush.msra.mxu0 %v472
    %502 = vmatpush.msra.mxu0 %v468
    %503 = vmatpush.msra.mxu0 %v464
    %504 = vmatpush.msra.mxu0 %v460
    %505 = vmatmul.f32.gmra.mxu0 %v478
    %v506 = vpop.f32.mrf.mxu0
    %v507 = vadd.f32 0.0, %v506
    %508 = vmatmul.f32.gmra.mxu0 %v481
    %v509 = vpop.f32.mrf.mxu0
    %v510 = vadd.f32 0.0, %v509
    %511 = vmatmul.f32.gmra.mxu0 %v484
    %v512 = vpop.f32.mrf.mxu0
    %v513 = vadd.f32 0.0, %v512
    %514 = vmatmul.f32.gmra.mxu0 %v487
    %v515 = vpop.f32.mrf.mxu0
    %v516 = vadd.f32 0.0, %v515
    %517 = vdwg.mxu0
    %518 = vmatpush.msra.mxu0 0.0
    %519 = vmatpush.msra.mxu0 0.0
    %520 = vmatpush.msra.mxu0 0.0
    %521 = vmatpush.msra.mxu0 0.0
    %522 = vmatpush.msra.mxu0 0.0
    %523 = vmatpush.msra.mxu0 0.0
    %524 = vmatpush.msra.mxu0 0.0
    %525 = vmatpush.msra.mxu0 0.0
    %526 = vmatpush.msra.mxu0 0.0
    %527 = vmatpush.msra.mxu0 0.0
    %528 = vmatpush.msra.mxu0 0.0
    %529 = vmatpush.msra.mxu0 0.0
    %530 = vmatpush.msra.mxu0 %v473
    %531 = vmatpush.msra.mxu0 %v469
    %532 = vmatpush.msra.mxu0 %v465
    %533 = vmatpush.msra.mxu0 %v461
    %534 = vmatmul.f32.gmra.mxu0 %v478
    %v535 = vpop.f32.mrf.mxu0
    %v536 = vadd.f32 0.0, %v535
    %537 = vmatmul.f32.gmra.mxu0 %v481
    %v538 = vpop.f32.mrf.mxu0
    %v539 = vadd.f32 0.0, %v538
    %540 = vmatmul.f32.gmra.mxu0 %v484
    %v541 = vpop.f32.mrf.mxu0
    %v542 = vadd.f32 0.0, %v541
    %543 = vmatmul.f32.gmra.mxu0 %v487
    %v544 = vpop.f32.mrf.mxu0
    %v545 = vadd.f32 0.0, %v544
    %546 = vdwg.mxu0
    %547 = vmatpush.msra.mxu0 0.0
    %548 = vmatpush.msra.mxu0 0.0
    %549 = vmatpush.msra.mxu0 0.0
    %550 = vmatpush.msra.mxu0 0.0
    %551 = vmatpush.msra.mxu0 0.0
    %552 = vmatpush.msra.mxu0 0.0
    %553 = vmatpush.msra.mxu0 0.0
    %554 = vmatpush.msra.mxu0 0.0
    %555 = vmatpush.msra.mxu0 0.0
    %556 = vmatpush.msra.mxu0 0.0
    %557 = vmatpush.msra.mxu0 0.0
    %558 = vmatpush.msra.mxu0 0.0
    %559 = vmatpush.msra.mxu0 %v474
    %560 = vmatpush.msra.mxu0 %v470
    %561 = vmatpush.msra.mxu0 %v466
    %562 = vmatpush.msra.mxu0 %v462
    %563 = vmatmul.f32.gmra.mxu0 %v478
    %v564 = vpop.f32.mrf.mxu0
    %v565 = vadd.f32 0.0, %v564
    %566 = vmatmul.f32.gmra.mxu0 %v481
    %v567 = vpop.f32.mrf.mxu0
    %v568 = vadd.f32 0.0, %v567
    %569 = vmatmul.f32.gmra.mxu0 %v484
    %v570 = vpop.f32.mrf.mxu0
    %v571 = vadd.f32 0.0, %v570
    %572 = vmatmul.f32.gmra.mxu0 %v487
    %v573 = vpop.f32.mrf.mxu0
    %v574 = vadd.f32 0.0, %v573
    %575 = vdwg.mxu0
    %576 = vmatpush.msra.mxu0 0.0
    %577 = vmatpush.msra.mxu0 0.0
    %578 = vmatpush.msra.mxu0 0.0
    %579 = vmatpush.msra.mxu0 0.0
    %580 = vmatpush.msra.mxu0 0.0
    %581 = vmatpush.msra.mxu0 0.0
    %582 = vmatpush.msra.mxu0 0.0
    %583 = vmatpush.msra.mxu0 0.0
    %584 = vmatpush.msra.mxu0 0.0
    %585 = vmatpush.msra.mxu0 0.0
    %586 = vmatpush.msra.mxu0 0.0
    %587 = vmatpush.msra.mxu0 0.0
    %588 = vmatpush.msra.mxu0 %v475
    %589 = vmatpush.msra.mxu0 %v471
    %590 = vmatpush.msra.mxu0 %v467
    %591 = vmatpush.msra.mxu0 %v463
    %592 = vmatmul.f32.gmra.mxu0 %v478
    %v593 = vpop.f32.mrf.mxu0
    %v594 = vadd.f32 0.0, %v593
    %595 = vmatmul.f32.gmra.mxu0 %v481
    %v596 = vpop.f32.mrf.mxu0
    %v597 = vadd.f32 0.0, %v596
    %598 = vmatmul.f32.gmra.mxu0 %v484
    %v599 = vpop.f32.mrf.mxu0
    %v600 = vadd.f32 0.0, %v599
    %601 = vmatmul.f32.gmra.mxu0 %v487
    %v602 = vpop.f32.mrf.mxu0
    %v603 = vadd.f32 0.0, %v602
    %604 = vdwg.mxu0
    %v605 = vand.u32 %v144, 15
    %v606 = vand.u32 %v145, 15
    %v607 = vand.u32 %v419, 15
    %v608 = vand.u32 %v420, 15
    %v609 = vshra.s32 %v147, 5
    %v610 = vshra.s32 %v421, 5
    %v611 = vshra.s32 %v422, 5
    %v612 = vshra.s32 %v423, 5
    %vm613 = vcmp.eq.s32.totalorder %v605, %v609
    %vm614 = vcmp.eq.s32.totalorder %v605, %v610
    %vm615 = vcmp.eq.s32.totalorder %v605, %v611
    %vm616 = vcmp.eq.s32.totalorder %v605, %v612
    %vm617 = vcmp.eq.s32.totalorder %v606, %v609
    %vm618 = vcmp.eq.s32.totalorder %v606, %v610
    %vm619 = vcmp.eq.s32.totalorder %v606, %v611
    %vm620 = vcmp.eq.s32.totalorder %v606, %v612
    %vm621 = vcmp.eq.s32.totalorder %v607, %v609
    %vm622 = vcmp.eq.s32.totalorder %v607, %v610
    %vm623 = vcmp.eq.s32.totalorder %v607, %v611
    %vm624 = vcmp.eq.s32.totalorder %v607, %v612
    %vm625 = vcmp.eq.s32.totalorder %v608, %v609
    %vm626 = vcmp.eq.s32.totalorder %v608, %v610
    %vm627 = vcmp.eq.s32.totalorder %v608, %v611
    %vm628 = vcmp.eq.s32.totalorder %v608, %v612
    %v629 = vsel %vm613, 1, 0
    %v630 = vsel %vm614, 1, 0
    %v631 = vsel %vm615, 1, 0
    %v632 = vsel %vm616, 1, 0
    %v633 = vsel %vm617, 1, 0
    %v634 = vsel %vm618, 1, 0
    %v635 = vsel %vm619, 1, 0
    %v636 = vsel %vm620, 1, 0
    %v637 = vsel %vm621, 1, 0
    %v638 = vsel %vm622, 1, 0
    %v639 = vsel %vm623, 1, 0
    %v640 = vsel %vm624, 1, 0
    %v641 = vsel %vm625, 1, 0
    %v642 = vsel %vm626, 1, 0
    %v643 = vsel %vm627, 1, 0
    %v644 = vsel %vm628, 1, 0
    %v645 = vcvt.s32.f32 %v629
    %v646 = vcvt.s32.f32 %v630
    %v647 = vcvt.s32.f32 %v631
    %v648 = vcvt.s32.f32 %v632
    %v649 = vcvt.s32.f32 %v633
    %v650 = vcvt.s32.f32 %v634
    %v651 = vcvt.s32.f32 %v635
    %v652 = vcvt.s32.f32 %v636
    %v653 = vcvt.s32.f32 %v637
    %v654 = vcvt.s32.f32 %v638
    %v655 = vcvt.s32.f32 %v639
    %v656 = vcvt.s32.f32 %v640
    %v657 = vcvt.s32.f32 %v641
    %v658 = vcvt.s32.f32 %v642
    %v659 = vcvt.s32.f32 %v643
    %v660 = vcvt.s32.f32 %v644
    %v661 = vshra.s32 %v147, 4
    %vm662 = vcmp.eq.s32.totalorder %v661, %v144
    %v663 = vsel %vm662, 1, 0
    %v664 = vcvt.s32.f32 %v663
    %v665 = vmul.f32 %v507, %v645
    %v666 = vmul.f32 %v536, %v646
    %v667 = vmul.f32 %v565, %v647
    %v668 = vmul.f32 %v594, %v648
    %v669 = vmul.f32 %v510, %v649
    %v670 = vmul.f32 %v539, %v650
    %v671 = vmul.f32 %v568, %v651
    %v672 = vmul.f32 %v597, %v652
    %v673 = vmul.f32 %v513, %v653
    %v674 = vmul.f32 %v542, %v654
    %v675 = vmul.f32 %v571, %v655
    %v676 = vmul.f32 %v600, %v656
    %v677 = vmul.f32 %v516, %v657
    %v678 = vmul.f32 %v545, %v658
    %v679 = vmul.f32 %v574, %v659
    %v680 = vmul.f32 %v603, %v660
    %v682 = vsel %vm476, %v664, 0
    %684 = vmatpush.msra.mxu0 0.0
    %685 = vmatpush.msra.mxu0 0.0
    %686 = vmatpush.msra.mxu0 0.0
    %687 = vmatpush.msra.mxu0 0.0
    %688 = vmatpush.msra.mxu0 0.0
    %689 = vmatpush.msra.mxu0 0.0
    %690 = vmatpush.msra.mxu0 0.0
    %691 = vmatpush.msra.mxu0 0.0
    %692 = vmatpush.msra.mxu0 0.0
    %693 = vmatpush.msra.mxu0 0.0
    %694 = vmatpush.msra.mxu0 0.0
    %695 = vmatpush.msra.mxu0 0.0
    %696 = vmatpush.msra.mxu0 %v677
    %697 = vmatpush.msra.mxu0 %v673
    %698 = vmatpush.msra.mxu0 %v669
    %699 = vmatpush.msra.mxu0 %v665
    %700 = vmatmul.f32.gmra.mxu0 %v682
    %v701 = vpop.f32.mrf.mxu0
    %v702 = vadd.f32 0.0, %v701
    %703 = vdwg.mxu0
    %704 = vmatpush.msra.mxu0 0.0
    %705 = vmatpush.msra.mxu0 0.0
    %706 = vmatpush.msra.mxu0 0.0
    %707 = vmatpush.msra.mxu0 0.0
    %708 = vmatpush.msra.mxu0 0.0
    %709 = vmatpush.msra.mxu0 0.0
    %710 = vmatpush.msra.mxu0 0.0
    %711 = vmatpush.msra.mxu0 0.0
    %712 = vmatpush.msra.mxu0 0.0
    %713 = vmatpush.msra.mxu0 0.0
    %714 = vmatpush.msra.mxu0 0.0
    %715 = vmatpush.msra.mxu0 0.0
    %716 = vmatpush.msra.mxu0 %v678
    %717 = vmatpush.msra.mxu0 %v674
    %718 = vmatpush.msra.mxu0 %v670
    %719 = vmatpush.msra.mxu0 %v666
    %720 = vmatmul.f32.gmra.mxu0 %v682
    %v721 = vpop.f32.mrf.mxu0
    %v722 = vadd.f32 0.0, %v721
    %723 = vdwg.mxu0
    %724 = vmatpush.msra.mxu0 0.0
    %725 = vmatpush.msra.mxu0 0.0
    %726 = vmatpush.msra.mxu0 0.0
    %727 = vmatpush.msra.mxu0 0.0
    %728 = vmatpush.msra.mxu0 0.0
    %729 = vmatpush.msra.mxu0 0.0
    %730 = vmatpush.msra.mxu0 0.0
    %731 = vmatpush.msra.mxu0 0.0
    %732 = vmatpush.msra.mxu0 0.0
    %733 = vmatpush.msra.mxu0 0.0
    %734 = vmatpush.msra.mxu0 0.0
    %735 = vmatpush.msra.mxu0 0.0
    %736 = vmatpush.msra.mxu0 %v679
    %737 = vmatpush.msra.mxu0 %v675
    %738 = vmatpush.msra.mxu0 %v671
    %739 = vmatpush.msra.mxu0 %v667
    %740 = vmatmul.f32.gmra.mxu0 %v682
    %v741 = vpop.f32.mrf.mxu0
    %v742 = vadd.f32 0.0, %v741
    %743 = vdwg.mxu0
    %744 = vmatpush.msra.mxu0 0.0
    %745 = vmatpush.msra.mxu0 0.0
    %746 = vmatpush.msra.mxu0 0.0
    %747 = vmatpush.msra.mxu0 0.0
    %748 = vmatpush.msra.mxu0 0.0
    %749 = vmatpush.msra.mxu0 0.0
    %750 = vmatpush.msra.mxu0 0.0
    %751 = vmatpush.msra.mxu0 0.0
    %752 = vmatpush.msra.mxu0 0.0
    %753 = vmatpush.msra.mxu0 0.0
    %754 = vmatpush.msra.mxu0 0.0
    %755 = vmatpush.msra.mxu0 0.0
    %756 = vmatpush.msra.mxu0 %v680
    %757 = vmatpush.msra.mxu0 %v676
    %758 = vmatpush.msra.mxu0 %v672
    %759 = vmatpush.msra.mxu0 %v668
    %760 = vmatmul.f32.gmra.mxu0 %v682
    %v761 = vpop.f32.mrf.mxu0
    %v762 = vadd.f32 0.0, %v761
    %763 = vdwg.mxu0
    %v764 = vld [vmem:[%s5] sm:$0xff]
    %v765 = vld [vmem:[%s5 + $0x8] sm:$0xff]
    %v766 = vld [vmem:[%s5 + $0x10] sm:$0xff]
    %v767 = vld [vmem:[%s5 + $0x18] sm:$0xff]
    %v768 = vld [vmem:[%s5 + $0x20] sm:$0xff]
    %v769 = vld [vmem:[%s5 + $0x28] sm:$0xff]
    %v770 = vld [vmem:[%s5 + $0x30] sm:$0xff]
    %v771 = vld [vmem:[%s5 + $0x38] sm:$0xff]
    %v772 = vld [vmem:[%s5 + $0x40] sm:$0xff]
    %v773 = vld [vmem:[%s5 + $0x48] sm:$0xff]
    %v774 = vld [vmem:[%s5 + $0x50] sm:$0xff]
    %v775 = vld [vmem:[%s5 + $0x58] sm:$0xff]
    %v776 = vld [vmem:[%s5 + $0x60] sm:$0xff]
    %v777 = vld [vmem:[%s5 + $0x68] sm:$0xff]
    %v778 = vld [vmem:[%s5 + $0x70] sm:$0xff]
    %v779 = vld [vmem:[%s5 + $0x78] sm:$0xff]
    %v780 = vld [vmem:[%s5 + $0x80] sm:$0xff]
    %v781 = vld [vmem:[%s5 + $0x88] sm:$0xff]
    %v782 = vld [vmem:[%s5 + $0x90] sm:$0xff]
    %v783 = vld [vmem:[%s5 + $0x98] sm:$0xff]
    %v784 = vld [vmem:[%s5 + $0xa0] sm:$0xff]
    %v785 = vld [vmem:[%s5 + $0xa8] sm:$0xff]
    %v786 = vld [vmem:[%s5 + $0xb0] sm:$0xff]
    %v787 = vld [vmem:[%s5 + $0xb8] sm:$0xff]
    %v788 = vld [vmem:[%s5 + $0xc0] sm:$0xff]
    %v789 = vld [vmem:[%s5 + $0xc8] sm:$0xff]
    %v790 = vld [vmem:[%s5 + $0xd0] sm:$0xff]
    %v791 = vld [vmem:[%s5 + $0xd8] sm:$0xff]
    %v792 = vld [vmem:[%s5 + $0xe0] sm:$0xff]
    %v793 = vld [vmem:[%s5 + $0xe8] sm:$0xff]
    %v794 = vld [vmem:[%s5 + $0xf0] sm:$0xff]
    %v795 = vld [vmem:[%s5 + $0xf8] sm:$0xff]
    %v796 = vld [vmem:[%s5 + $0x100] sm:$0xff]
    %v797 = vld [vmem:[%s5 + $0x108] sm:$0xff]
    %v798 = vld [vmem:[%s5 + $0x110] sm:$0xff]
    %v799 = vld [vmem:[%s5 + $0x118] sm:$0xff]
    %v800 = vld [vmem:[%s5 + $0x120] sm:$0xff]
    %v801 = vld [vmem:[%s5 + $0x128] sm:$0xff]
    %v802 = vld [vmem:[%s5 + $0x130] sm:$0xff]
    %v803 = vld [vmem:[%s5 + $0x138] sm:$0xff]
    %v804 = vld [vmem:[%s5 + $0x140] sm:$0xff]
    %v805 = vld [vmem:[%s5 + $0x148] sm:$0xff]
    %v806 = vld [vmem:[%s5 + $0x150] sm:$0xff]
    %v807 = vld [vmem:[%s5 + $0x158] sm:$0xff]
    %v808 = vld [vmem:[%s5 + $0x160] sm:$0xff]
    %v809 = vld [vmem:[%s5 + $0x168] sm:$0xff]
    %v810 = vld [vmem:[%s5 + $0x170] sm:$0xff]
    %v811 = vld [vmem:[%s5 + $0x178] sm:$0xff]
    %v812 = vld [vmem:[%s5 + $0x180] sm:$0xff]
    %v813 = vld [vmem:[%s5 + $0x188] sm:$0xff]
    %v814 = vld [vmem:[%s5 + $0x190] sm:$0xff]
    %v815 = vld [vmem:[%s5 + $0x198] sm:$0xff]
    %v816 = vld [vmem:[%s5 + $0x1a0] sm:$0xff]
    %v817 = vld [vmem:[%s5 + $0x1a8] sm:$0xff]
    %v818 = vld [vmem:[%s5 + $0x1b0] sm:$0xff]
    %v819 = vld [vmem:[%s5 + $0x1b8] sm:$0xff]
    %v820 = vld [vmem:[%s5 + $0x1c0] sm:$0xff]
    %v821 = vld [vmem:[%s5 + $0x1c8] sm:$0xff]
    %v822 = vld [vmem:[%s5 + $0x1d0] sm:$0xff]
    %v823 = vld [vmem:[%s5 + $0x1d8] sm:$0xff]
    %v824 = vld [vmem:[%s5 + $0x1e0] sm:$0xff]
    %v825 = vld [vmem:[%s5 + $0x1e8] sm:$0xff]
    %v826 = vld [vmem:[%s5 + $0x1f0] sm:$0xff]
    %v827 = vld [vmem:[%s5 + $0x1f8] sm:$0xff]
    %v828 = vld [vmem:[%s6] sm:$0x1]
    %v830 = vperm.slane %v828, 0
    %832 = vmatpush.msra.mxu0 %v779
    %833 = vmatpush.msra.mxu0 %v778
    %834 = vmatpush.msra.mxu0 %v777
    %835 = vmatpush.msra.mxu0 %v776
    %836 = vmatpush.msra.mxu0 %v775
    %837 = vmatpush.msra.mxu0 %v774
    %838 = vmatpush.msra.mxu0 %v773
    %839 = vmatpush.msra.mxu0 %v772
    %840 = vmatpush.msra.mxu0 %v771
    %841 = vmatpush.msra.mxu0 %v770
    %842 = vmatpush.msra.mxu0 %v769
    %843 = vmatpush.msra.mxu0 %v768
    %844 = vmatpush.msra.mxu0 %v767
    %845 = vmatpush.msra.mxu0 %v766
    %846 = vmatpush.msra.mxu0 %v765
    %847 = vmatpush.msra.mxu0 %v764
    %848 = vmatmul.f32.gmra.mxu0 %v702
    %v849 = vpop.f32.mrf.mxu0
    %v850 = vadd.f32 %v830, %v849
    %851 = vdwg.mxu0
    %852 = vmatpush.msra.mxu0 %v795
    %853 = vmatpush.msra.mxu0 %v794
    %854 = vmatpush.msra.mxu0 %v793
    %855 = vmatpush.msra.mxu0 %v792
    %856 = vmatpush.msra.mxu0 %v791
    %857 = vmatpush.msra.mxu0 %v790
    %858 = vmatpush.msra.mxu0 %v789
    %859 = vmatpush.msra.mxu0 %v788
    %860 = vmatpush.msra.mxu0 %v787
    %861 = vmatpush.msra.mxu0 %v786
    %862 = vmatpush.msra.mxu0 %v785
    %863 = vmatpush.msra.mxu0 %v784
    %864 = vmatpush.msra.mxu0 %v783
    %865 = vmatpush.msra.mxu0 %v782
    %866 = vmatpush.msra.mxu0 %v781
    %867 = vmatpush.msra.mxu0 %v780
    %868 = vmatmul.f32.gmra.mxu0 %v722
    %v869 = vpop.f32.mrf.mxu0
    %v870 = vadd.f32 %v850, %v869
    %871 = vdwg.mxu0
    %872 = vmatpush.msra.mxu0 %v811
    %873 = vmatpush.msra.mxu0 %v810
    %874 = vmatpush.msra.mxu0 %v809
    %875 = vmatpush.msra.mxu0 %v808
    %876 = vmatpush.msra.mxu0 %v807
    %877 = vmatpush.msra.mxu0 %v806
    %878 = vmatpush.msra.mxu0 %v805
    %879 = vmatpush.msra.mxu0 %v804
    %880 = vmatpush.msra.mxu0 %v803
    %881 = vmatpush.msra.mxu0 %v802
    %882 = vmatpush.msra.mxu0 %v801
    %883 = vmatpush.msra.mxu0 %v800
    %884 = vmatpush.msra.mxu0 %v799
    %885 = vmatpush.msra.mxu0 %v798
    %886 = vmatpush.msra.mxu0 %v797
    %887 = vmatpush.msra.mxu0 %v796
    %888 = vmatmul.f32.gmra.mxu0 %v742
    %v889 = vpop.f32.mrf.mxu0
    %v890 = vadd.f32 %v870, %v889
    %891 = vdwg.mxu0
    %892 = vmatpush.msra.mxu0 %v827
    %893 = vmatpush.msra.mxu0 %v826
    %894 = vmatpush.msra.mxu0 %v825
    %895 = vmatpush.msra.mxu0 %v824
    %896 = vmatpush.msra.mxu0 %v823
    %897 = vmatpush.msra.mxu0 %v822
    %898 = vmatpush.msra.mxu0 %v821
    %899 = vmatpush.msra.mxu0 %v820
    %900 = vmatpush.msra.mxu0 %v819
    %901 = vmatpush.msra.mxu0 %v818
    %902 = vmatpush.msra.mxu0 %v817
    %903 = vmatpush.msra.mxu0 %v816
    %904 = vmatpush.msra.mxu0 %v815
    %905 = vmatpush.msra.mxu0 %v814
    %906 = vmatpush.msra.mxu0 %v813
    %907 = vmatpush.msra.mxu0 %v812
    %908 = vmatmul.f32.gmra.mxu0 %v762
    %v909 = vpop.f32.mrf.mxu0
    %v910 = vadd.f32 %v890, %v909
    %911 = vdwg.mxu0
    %v912 = vmax.f32 %v910, 0.0
    %v913 = vld [vmem:[%s7] sm:$0xff]
    %v914 = vld [vmem:[%s7 + $0x8] sm:$0xff]
    %v915 = vld [vmem:[%s7 + $0x10] sm:$0xff]
    %v916 = vld [vmem:[%s7 + $0x18] sm:$0xff]
    %v917 = vld [vmem:[%s7 + $0x20] sm:$0xff]
    %v918 = vld [vmem:[%s7 + $0x28] sm:$0xff]
    %v919 = vld [vmem:[%s7 + $0x30] sm:$0xff]
    %v920 = vld [vmem:[%s7 + $0x38] sm:$0xff]
    %v921 = vld [vmem:[%s8] sm:$0x1]
    %v923 = vperm.slane %v921, 0
    %vm925 = vcmask 523264
    %v927 = vsel %vm925, %v912, 0
    %929 = vmatpush.msra.mxu0 0.0
    %930 = vmatpush.msra.mxu0 0.0
    %931 = vmatpush.msra.mxu0 0.0
    %932 = vmatpush.msra.mxu0 0.0
    %933 = vmatpush.msra.mxu0 0.0
    %934 = vmatpush.msra.mxu0 0.0
    %935 = vmatpush.msra.mxu0 0.0
    %936 = vmatpush.msra.mxu0 0.0
    %937 = vmatpush.msra.mxu0 %v920
    %938 = vmatpush.msra.mxu0 %v919
    %939 = vmatpush.msra.mxu0 %v918
    %940 = vmatpush.msra.mxu0 %v917
    %941 = vmatpush.msra.mxu0 %v916
    %942 = vmatpush.msra.mxu0 %v915
    %943 = vmatpush.msra.mxu0 %v914
    %944 = vmatpush.msra.mxu0 %v913
    %945 = vmatmul.f32.gmra.mxu0 %v927
    %v946 = vpop.f32.mrf.mxu0
    %v947 = vadd.f32 %v923, %v946
    %948 = vdwg.mxu0
    %vm949 = vcmask 17408
    %950 = vst.msk [vmem:[#allocation2] sm:$0x3] %vm949, %v947
    // Predicated region
    $region38: #{dgcnn_forward.1} parent=1 // pred_check
      _
    $region39: #{dgcnn_forward.1} parent=1 // pred_check_branch
      %952 = sbr.rel (0) target = $region41
    $region40: #{dgcnn_forward.1} parent=1 // pred_region
      %954 = vsyncadd [#allocation3], 0
      %s956 = sshll.u32 [#allocation2], 4
      %s957 = int_to_ptr.vmem [resolvable:$true] %s956
      %s958 = sshll.u32 %s9, 4
      %s959 = int_to_ptr.hbm [resolvable:$true] %s958
      %961 = dma.vmem_to_hbm [thread:$0]  %s957, 32, %s959, [#allocation3]
    $region41: #{dgcnn_forward.1} parent=1 // pred_fallthru
      _
    // Predicated region
    $region42: #{dgcnn_forward.1} parent=1 // pred_check
      _
    $region43: #{dgcnn_forward.1} parent=1 // pred_check_branch
      %963 = sbr.rel (0) target = $region45
    $region44: #{dgcnn_forward.1} parent=1 // pred_region
      %965 = dma.done [#allocation3], 32
    $region45: #{dgcnn_forward.1} parent=1 // pred_fallthru
      _
    %966 = vsyncpa [#allocation3], 1

</llo_original>
